<compile_context>
chip_gen: v5e
topology: v5e:2x2
jax: 0.10.0
libtpu: 0.0.40
codegen_flags: <defaults>
</compile_context>

<pallas_src>
import functools

import jax
import jax.numpy as jnp
from jax.experimental import pallas as pl
from jax.experimental.pallas import tpu as pltpu

_LANE = 128
_SUBLANE = 8
_NEG_BIG = -1e30          # "minus infinity" for padded logit columns (f32 exp -> exactly 0)
_MAX_TILE_B = 512         # per-review sweet spot for the streamed batch tile
_VMEM_BUDGET = 48 << 20   # conservative working-set budget (fits every generation)
_VMEM_LIMIT_CAP = 56 << 20  # never ask for more scoped VMEM than v7x can give per TC


def _round_up(n, m):
    return ((n + m - 1) // m) * m


def _per_row_bytes(k_pad, h_pad, n_pad):
    # double-buffered bf16 x tile + double-buffered f32 out tile
    # + f32 h1 + bf16 h1 + f32 h2 / softmax temporaries
    return (2 * k_pad * 2) + (2 * n_pad * 4) + h_pad * 4 + h_pad * 2 + 2 * n_pad * 4


def _pick_tile_b(batch, k_pad, h_pad, n_pad, weight_bytes):
    per_row = _per_row_bytes(k_pad, h_pad, n_pad)
    avail = _VMEM_BUDGET - weight_bytes
    if avail < per_row * _SUBLANE:
        # TODO(synk): for very large fts_dim/hidden_dim the resident-weight design
        # stops fitting per-TC VMEM (esp. v7x); a K/N-tiled accumulator fallback
        # (grid=(batch_tiles, k_tiles), pl.when init/finalize) would be needed.
        return max(1, min(batch, _SUBLANE))
    cap = max(_SUBLANE, (avail // per_row) // _SUBLANE * _SUBLANE)
    if batch <= 16:
        tile = batch  # whole batch in one step
    else:
        # >=2 grid steps so ("parallel",) can use both TensorCores on v7x.
        tile = min(_MAX_TILE_B, _round_up(pl.cdiv(batch, 2), _SUBLANE))
    return max(1, min(tile, cap, batch))


def _resident_spec(block_shape, single_buffer):
    """Whole-array-resident block (constant index_map). Single-buffer if possible."""
    index_map = lambda i: (0, 0)
    if single_buffer:
        try:
            return pl.BlockSpec(block_shape, index_map, pipeline_mode=pl.Buffered(1))
        except (AttributeError, TypeError):
            pass
    return pl.BlockSpec(block_shape, index_map)


def mlp_kernel(x_ref, w1_ref, b1_ref, w2_ref, b2_ref, o_ref):
    # x tile: (tile_b, k_pad) bf16; weights/biases are whole-array resident blocks.
    # fc1 + ReLU: bf16 MXU matmul, f32 accumulation; bias add + ReLU in f32.
    h1 = jnp.dot(x_ref[...], w1_ref[...], preferred_element_type=jnp.float32)
    h1 = jnp.maximum(h1 + b1_ref[...], 0.0).astype(jnp.bfloat16)

    # fc2: padded output columns have zero weights and a -1e30 f32 bias, so they
    # contribute exactly 0 to the log-sum-exp below.
    h2 = jnp.dot(h1, w2_ref[...], preferred_element_type=jnp.float32) + b2_ref[...]

    # Numerically stable log_softmax along dim=1 (last dim of the 2D input).
    m = jnp.max(h2, axis=-1, keepdims=True)
    shifted = h2 - m
    lse = jnp.log(jnp.sum(jnp.exp(shifted), axis=-1, keepdims=True))
    o_ref[...] = (shifted - lse).astype(o_ref.dtype)


def prepare_params(w1, b1, w2, b2):
    """Cast weights to bf16 and zero-pad every dim to a multiple of 128 (exact)."""
    fts_dim, hidden_dim = w1.shape
    out_dim = w2.shape[1]
    k_pad = _round_up(fts_dim, _LANE)
    h_pad = _round_up(hidden_dim, _LANE)
    n_pad = _round_up(out_dim, _LANE)

    w1p = jnp.pad(w1.astype(jnp.bfloat16),
                  ((0, k_pad - fts_dim), (0, h_pad - hidden_dim)))
    b1p = jnp.pad(jnp.asarray(b1, jnp.float32).reshape(1, -1),
                  ((0, 0), (0, h_pad - hidden_dim)))
    w2p = jnp.pad(w2.astype(jnp.bfloat16),
                  ((0, h_pad - hidden_dim), (0, n_pad - out_dim)))
    # Padded logit columns get a huge-negative bias; must stay f32 (bf16 would overflow).
    b2p = jnp.pad(jnp.asarray(b2, jnp.float32).reshape(1, -1),
                  ((0, 0), (0, n_pad - out_dim)), constant_values=_NEG_BIG)
    return w1p, b1p, w2p, b2p


@functools.partial(jax.jit, static_argnames=("out_dim", "single_buffer_weights"))
def _mlp_forward_impl(x, w1p, b1p, w2p, b2p, *, out_dim, single_buffer_weights=True):
    batch, fts_dim = x.shape
    k_pad, h_pad = w1p.shape
    n_pad = w2p.shape[1]

    # Lane-dense bf16 input (zero-padded K is exact for x @ W1).
    xb = x.astype(jnp.bfloat16)
    if k_pad != fts_dim:
        xb = jnp.pad(xb, ((0, 0), (0, k_pad - fts_dim)))

    weight_bytes = (w1p.size + w2p.size) * 2 + (b1p.size + b2p.size) * 4
    tile_b = _pick_tile_b(batch, k_pad, h_pad, n_pad, weight_bytes)
    grid = (pl.cdiv(batch, tile_b),)

    vmem_need = weight_bytes + tile_b * _per_row_bytes(k_pad, h_pad, n_pad)
    vmem_limit = int(min(max(int(vmem_need * 1.5) + (4 << 20), 32 << 20),
                         _VMEM_LIMIT_CAP))

    flops = 2 * batch * (k_pad * h_pad + h_pad * n_pad)
    transcendentals = batch * (n_pad + 1)            # exp per logit + log per row
    bytes_accessed = (xb.size * 2 + (w1p.size + w2p.size) * 2
                      + (b1p.size + b2p.size) * 4 + batch * n_pad * 4)

    out_padded = pl.pallas_call(
        mlp_kernel,
        out_shape=jax.ShapeDtypeStruct((batch, n_pad), jnp.float32),
        grid=grid,
        in_specs=[
            pl.BlockSpec((tile_b, k_pad), lambda i: (i, 0)),        # x: streamed over batch
            _resident_spec((k_pad, h_pad), single_buffer_weights),  # W1 (padded, bf16)
            _resident_spec((1, h_pad), single_buffer_weights),      # b1 (padded, f32)
            _resident_spec((h_pad, n_pad), single_buffer_weights),  # W2 (padded, bf16)
            _resident_spec((1, n_pad), single_buffer_weights),      # b2 (padded, f32)
        ],
        out_specs=pl.BlockSpec((tile_b, n_pad), lambda i: (i, 0)),
        compiler_params=pltpu.CompilerParams(
            dimension_semantics=("parallel",),  # shard batch tiles across TCs on v7x
            vmem_limit_bytes=vmem_limit,
        ),
        cost_estimate=pl.CostEstimate(
            flops=flops,
            transcendentals=transcendentals,
            bytes_accessed=bytes_accessed,
        ),
    )(xb, w1p, b1p, w2p, b2p)

    # NOTE: this slice is an extra pass over the padded output; consumers that can
    # take padded logits should use out_padded directly (padded cols hold ~-1e30).
    return out_padded[:, :out_dim]


def mlp_forward(x, w1, b1, w2, b2):
    """Forward pass matching the PyTorch MLP: log_softmax(fc2(relu(fc1(x))), dim=1)."""
    w1p, b1p, w2p, b2p = prepare_params(w1, b1, w2, b2)
    out_dim = w2.shape[1]
    try:
        return _mlp_forward_impl(x, w1p, b1p, w2p, b2p, out_dim=out_dim,
                                 single_buffer_weights=True)
    except Exception:
        # Fallback for jax builds that reject Buffered(1) on the outer pipeline.
        return _mlp_forward_impl(x, w1p, b1p, w2p, b2p, out_dim=out_dim,
                                 single_buffer_weights=False)


def init_params(key, fts_dim, hidden_dim, output_dim):
    # Deterministic synthetic init (uniform, a la PyTorch Linear default ranges).
    k1, k2, k3, k4 = jax.random.split(key, 4)
    bound1 = 1.0 / jnp.sqrt(fts_dim)
    bound2 = 1.0 / jnp.sqrt(hidden_dim)
    w1 = jax.random.uniform(k1, (fts_dim, hidden_dim), jnp.float32, -bound1, bound1)
    b1 = jax.random.uniform(k2, (1, hidden_dim), jnp.float32, -bound1, bound1)
    w2 = jax.random.uniform(k3, (hidden_dim, output_dim), jnp.float32, -bound2, bound2)
    b2 = jax.random.uniform(k4, (1, output_dim), jnp.float32, -bound2, bound2)
    return w1, b1, w2, b2


if __name__ == "__main__":
    fts_dim, hidden_dim, output_dim = 32, 64, 16
    batch = 8

    key = jax.random.PRNGKey(0)
    kx, kp = jax.random.split(key)
    x = jax.random.normal(kx, (batch, fts_dim), jnp.float32)
    w1, b1, w2, b2 = init_params(kp, fts_dim, hidden_dim, output_dim)

    out = mlp_forward(x, w1, b1, w2, b2)
    jax.block_until_ready(out)

    # Reference in plain JAX using the same bf16 operands / f32 accumulation.
    xb = x.astype(jnp.bfloat16)
    h1_ref = jnp.maximum(
        jnp.dot(xb, w1.astype(jnp.bfloat16), preferred_element_type=jnp.float32) + b1,
        0.0,
    ).astype(jnp.bfloat16)
    h2_ref = jnp.dot(h1_ref, w2.astype(jnp.bfloat16),
                     preferred_element_type=jnp.float32) + b2
    ref = jax.nn.log_softmax(h2_ref, axis=1)

    assert out.shape == ref.shape, "shape mismatch vs reference"
    assert jnp.allclose(out, ref, atol=2e-3, rtol=2e-3), "mismatch vs reference"

    print("KERNEL_OK")
</pallas_src>

<mosaic_0001>
module attributes {stable_mosaic.version = 11 : i64} {
  func.func @mlp_kernel(%arg0: i32, %arg1: memref<8x128xbf16, #tpu.memory_space<vmem>>, %arg2: memref<128x128xbf16, #tpu.memory_space<vmem>>, %arg3: memref<1x128xf32, #tpu.memory_space<vmem>>, %arg4: memref<128x128xbf16, #tpu.memory_space<vmem>>, %arg5: memref<1x128xf32, #tpu.memory_space<vmem>>, %arg6: memref<8x128xf32, #tpu.memory_space<vmem>>) attributes {dimension_semantics = [#tpu.dimension_semantics<parallel>], iteration_bounds = array<i64: 1>, scalar_prefetch = 0 : i64, scratch_operands = 0 : i64, tpu.core_type = #tpu.core_type<tc>, window_params = [{transform_indices = @transform_0, window_bounds = array<i64: 8, 128>}, {pipeline_mode = #tpu.pipeline_mode<synchronous>, transform_indices = @transform_1, window_bounds = array<i64: 128, 128>}, {pipeline_mode = #tpu.pipeline_mode<synchronous>, transform_indices = @transform_2, window_bounds = array<i64: 1, 128>}, {pipeline_mode = #tpu.pipeline_mode<synchronous>, transform_indices = @transform_3, window_bounds = array<i64: 128, 128>}, {pipeline_mode = #tpu.pipeline_mode<synchronous>, transform_indices = @transform_4, window_bounds = array<i64: 1, 128>}, {transform_indices = @transform_5, window_bounds = array<i64: 8, 128>}]} {
    %c0 = arith.constant 0 : index
    %c0_0 = arith.constant 0 : index
    %0 = vector.load %arg1[%c0, %c0_0] : memref<8x128xbf16, #tpu.memory_space<vmem>>, vector<8x128xbf16>
    %c0_1 = arith.constant 0 : index
    %c0_2 = arith.constant 0 : index
    %1 = vector.load %arg2[%c0_1, %c0_2] : memref<128x128xbf16, #tpu.memory_space<vmem>>, vector<128x128xbf16>
    %cst = arith.constant dense<0.000000e+00> : vector<8x128xf32>
    %2 = tpu.matmul %0, %1, %cst {dimension_numbers = #tpu.dot_dimension_numbers<[1], [0], [0], [1], [0, 0, 1, 1], [], []>} : vector<8x128xbf16>, vector<128x128xbf16>, vector<8x128xf32> -> vector<8x128xf32>
    %c0_3 = arith.constant 0 : index
    %c0_4 = arith.constant 0 : index
    %3 = vector.load %arg3[%c0_3, %c0_4] : memref<1x128xf32, #tpu.memory_space<vmem>>, vector<1x128xf32>
    %4 = vector.broadcast %3 : vector<1x128xf32> to vector<8x128xf32>
    %5 = arith.addf %2, %4 : vector<8x128xf32>
    %cst_5 = arith.constant 0.000000e+00 : f32
    %6 = vector.broadcast %cst_5 : f32 to vector<8x128xf32>
    %7 = arith.maximumf %5, %6 : vector<8x128xf32>
    %8 = arith.truncf %7 : vector<8x128xf32> to vector<8x128xbf16>
    %c0_6 = arith.constant 0 : index
    %c0_7 = arith.constant 0 : index
    %9 = vector.load %arg4[%c0_6, %c0_7] : memref<128x128xbf16, #tpu.memory_space<vmem>>, vector<128x128xbf16>
    %cst_8 = arith.constant dense<0.000000e+00> : vector<8x128xf32>
    %10 = tpu.matmul %8, %9, %cst_8 {dimension_numbers = #tpu.dot_dimension_numbers<[1], [0], [0], [1], [0, 0, 1, 1], [], []>} : vector<8x128xbf16>, vector<128x128xbf16>, vector<8x128xf32> -> vector<8x128xf32>
    %c0_9 = arith.constant 0 : index
    %c0_10 = arith.constant 0 : index
    %11 = vector.load %arg5[%c0_9, %c0_10] : memref<1x128xf32, #tpu.memory_space<vmem>>, vector<1x128xf32>
    %12 = vector.broadcast %11 : vector<1x128xf32> to vector<8x128xf32>
    %13 = arith.addf %10, %12 : vector<8x128xf32>
    %cst_11 = arith.constant dense<0xFF800000> : vector<8xf32>
    %14 = vector.multi_reduction <maximumf>, %13, %cst_11 [1] : vector<8x128xf32> to vector<8xf32>
    %15 = vector.shape_cast %14 : vector<8xf32> to vector<8x1xf32>
    %16 = vector.broadcast %15 : vector<8x1xf32> to vector<8x128xf32>
    %17 = arith.subf %13, %16 : vector<8x128xf32>
    %18 = math.exp %17 : vector<8x128xf32>
    %cst_12 = arith.constant dense<0.000000e+00> : vector<8xf32>
    %19 = vector.multi_reduction <add>, %18, %cst_12 [1] : vector<8x128xf32> to vector<8xf32>
    %20 = vector.shape_cast %19 : vector<8xf32> to vector<8x1xf32>
    %21 = math.log %20 : vector<8x1xf32>
    %22 = vector.broadcast %21 : vector<8x1xf32> to vector<8x128xf32>
    %23 = arith.subf %17, %22 : vector<8x128xf32>
    %c0_13 = arith.constant 0 : index
    %c0_14 = arith.constant 0 : index
    %24 = vector.load %arg6[%c0_13, %c0_14] : memref<8x128xf32, #tpu.memory_space<vmem>>, vector<8x128xf32>
    tpu.vector_store %arg6[%c0_13, %c0_14], %23 {strides = array<i32>} : memref<8x128xf32, #tpu.memory_space<vmem>>, vector<8x128xf32>,
    return
  }
  func.func @transform_0(%arg0: i32) -> (i32, i32) {
    %c0_i32 = arith.constant 0 : i32
    %c0_i32_0 = arith.constant 0 : i32
    return %arg0, %c0_i32 : i32, i32
  }
  func.func @transform_1(%arg0: i32) -> (i32, i32) {
    %c0_i32 = arith.constant 0 : i32
    %c0_i32_0 = arith.constant 0 : i32
    %c0_i32_1 = arith.constant 0 : i32
    return %c0_i32, %c0_i32_0 : i32, i32
  }
  func.func @transform_2(%arg0: i32) -> (i32, i32) {
    %c0_i32 = arith.constant 0 : i32
    %c0_i32_0 = arith.constant 0 : i32
    %c0_i32_1 = arith.constant 0 : i32
    return %c0_i32, %c0_i32_0 : i32, i32
  }
  func.func @transform_3(%arg0: i32) -> (i32, i32) {
    %c0_i32 = arith.constant 0 : i32
    %c0_i32_0 = arith.constant 0 : i32
    %c0_i32_1 = arith.constant 0 : i32
    return %c0_i32, %c0_i32_0 : i32, i32
  }
  func.func @transform_4(%arg0: i32) -> (i32, i32) {
    %c0_i32 = arith.constant 0 : i32
    %c0_i32_0 = arith.constant 0 : i32
    %c0_i32_1 = arith.constant 0 : i32
    return %c0_i32, %c0_i32_0 : i32, i32
  }
  func.func @transform_5(%arg0: i32) -> (i32, i32) {
    %c0_i32 = arith.constant 0 : i32
    %c0_i32_0 = arith.constant 0 : i32
    return %arg0, %c0_i32 : i32, i32
  }
}

module attributes {stable_mosaic.version = 11 : i64} {
  func.func @mlp_kernel(%arg0: i32, %arg1: memref<8x128xbf16, #tpu.memory_space<vmem>>, %arg2: memref<128x128xbf16, #tpu.memory_space<vmem>>, %arg3: memref<1x128xf32, #tpu.memory_space<vmem>>, %arg4: memref<128x128xbf16, #tpu.memory_space<vmem>>, %arg5: memref<1x128xf32, #tpu.memory_space<vmem>>, %arg6: memref<8x128xf32, #tpu.memory_space<vmem>>) attributes {dimension_semantics = [#tpu.dimension_semantics<parallel>], iteration_bounds = array<i64: 1>, scalar_prefetch = 0 : i64, scratch_operands = 0 : i64, tpu.core_type = #tpu.core_type<tc>, window_params = [{transform_indices = @transform_0, window_bounds = array<i64: 8, 128>}, {pipeline_mode = #tpu.pipeline_mode<synchronous>, transform_indices = @transform_1, window_bounds = array<i64: 128, 128>}, {pipeline_mode = #tpu.pipeline_mode<synchronous>, transform_indices = @transform_2, window_bounds = array<i64: 1, 128>}, {pipeline_mode = #tpu.pipeline_mode<synchronous>, transform_indices = @transform_3, window_bounds = array<i64: 128, 128>}, {pipeline_mode = #tpu.pipeline_mode<synchronous>, transform_indices = @transform_4, window_bounds = array<i64: 1, 128>}, {transform_indices = @transform_5, window_bounds = array<i64: 8, 128>}]} {
    %c0 = arith.constant 0 : index
    %c0_0 = arith.constant 0 : index
    %0 = vector.load %arg1[%c0, %c0_0] : memref<8x128xbf16, #tpu.memory_space<vmem>>, vector<8x128xbf16>
    %c0_1 = arith.constant 0 : index
    %c0_2 = arith.constant 0 : index
    %1 = vector.load %arg2[%c0_1, %c0_2] : memref<128x128xbf16, #tpu.memory_space<vmem>>, vector<128x128xbf16>
    %cst = arith.constant dense<0.000000e+00> : vector<8x128xf32>
    %2 = tpu.matmul %0, %1, %cst {dimension_numbers = #tpu.dot_dimension_numbers<[1], [0], [0], [1], [0, 0, 1, 1], [], []>} : vector<8x128xbf16>, vector<128x128xbf16>, vector<8x128xf32> -> vector<8x128xf32>
    %c0_3 = arith.constant 0 : index
    %c0_4 = arith.constant 0 : index
    %3 = vector.load %arg3[%c0_3, %c0_4] : memref<1x128xf32, #tpu.memory_space<vmem>>, vector<1x128xf32>
    %4 = vector.broadcast %3 : vector<1x128xf32> to vector<8x128xf32>
    %5 = arith.addf %2, %4 : vector<8x128xf32>
    %cst_5 = arith.constant 0.000000e+00 : f32
    %6 = vector.broadcast %cst_5 : f32 to vector<8x128xf32>
    %7 = arith.maximumf %5, %6 : vector<8x128xf32>
    %8 = arith.truncf %7 : vector<8x128xf32> to vector<8x128xbf16>
    %c0_6 = arith.constant 0 : index
    %c0_7 = arith.constant 0 : index
    %9 = vector.load %arg4[%c0_6, %c0_7] : memref<128x128xbf16, #tpu.memory_space<vmem>>, vector<128x128xbf16>
    %cst_8 = arith.constant dense<0.000000e+00> : vector<8x128xf32>
    %10 = tpu.matmul %8, %9, %cst_8 {dimension_numbers = #tpu.dot_dimension_numbers<[1], [0], [0], [1], [0, 0, 1, 1], [], []>} : vector<8x128xbf16>, vector<128x128xbf16>, vector<8x128xf32> -> vector<8x128xf32>
    %c0_9 = arith.constant 0 : index
    %c0_10 = arith.constant 0 : index
    %11 = vector.load %arg5[%c0_9, %c0_10] : memref<1x128xf32, #tpu.memory_space<vmem>>, vector<1x128xf32>
    %12 = vector.broadcast %11 : vector<1x128xf32> to vector<8x128xf32>
    %13 = arith.addf %10, %12 : vector<8x128xf32>
    %cst_11 = arith.constant dense<0xFF800000> : vector<8xf32>
    %14 = vector.multi_reduction <maximumf>, %13, %cst_11 [1] : vector<8x128xf32> to vector<8xf32>
    %15 = vector.shape_cast %14 : vector<8xf32> to vector<8x1xf32>
    %16 = vector.broadcast %15 : vector<8x1xf32> to vector<8x128xf32>
    %17 = arith.subf %13, %16 : vector<8x128xf32>
    %18 = math.exp %17 : vector<8x128xf32>
    %cst_12 = arith.constant dense<0.000000e+00> : vector<8xf32>
    %19 = vector.multi_reduction <add>, %18, %cst_12 [1] : vector<8x128xf32> to vector<8xf32>
    %20 = vector.shape_cast %19 : vector<8xf32> to vector<8x1xf32>
    %21 = math.log %20 : vector<8x1xf32>
    %22 = vector.broadcast %21 : vector<8x1xf32> to vector<8x128xf32>
    %23 = arith.subf %17, %22 : vector<8x128xf32>
    %c0_13 = arith.constant 0 : index
    %c0_14 = arith.constant 0 : index
    %24 = vector.load %arg6[%c0_13, %c0_14] : memref<8x128xf32, #tpu.memory_space<vmem>>, vector<8x128xf32>
    tpu.vector_store %arg6[%c0_13, %c0_14], %23 {strides = array<i32>} : memref<8x128xf32, #tpu.memory_space<vmem>>, vector<8x128xf32>,
    return
  }
  func.func @transform_0(%arg0: i32) -> (i32, i32) {
    %c0_i32 = arith.constant 0 : i32
    %c0_i32_0 = arith.constant 0 : i32
    return %arg0, %c0_i32 : i32, i32
  }
  func.func @transform_1(%arg0: i32) -> (i32, i32) {
    %c0_i32 = arith.constant 0 : i32
    %c0_i32_0 = arith.constant 0 : i32
    %c0_i32_1 = arith.constant 0 : i32
    return %c0_i32, %c0_i32_0 : i32, i32
  }
  func.func @transform_2(%arg0: i32) -> (i32, i32) {
    %c0_i32 = arith.constant 0 : i32
    %c0_i32_0 = arith.constant 0 : i32
    %c0_i32_1 = arith.constant 0 : i32
    return %c0_i32, %c0_i32_0 : i32, i32
  }
  func.func @transform_3(%arg0: i32) -> (i32, i32) {
    %c0_i32 = arith.constant 0 : i32
    %c0_i32_0 = arith.constant 0 : i32
    %c0_i32_1 = arith.constant 0 : i32
    return %c0_i32, %c0_i32_0 : i32, i32
  }
  func.func @transform_4(%arg0: i32) -> (i32, i32) {
    %c0_i32 = arith.constant 0 : i32
    %c0_i32_0 = arith.constant 0 : i32
    %c0_i32_1 = arith.constant 0 : i32
    return %c0_i32, %c0_i32_0 : i32, i32
  }
  func.func @transform_5(%arg0: i32) -> (i32, i32) {
    %c0_i32 = arith.constant 0 : i32
    %c0_i32_0 = arith.constant 0 : i32
    return %arg0, %c0_i32 : i32, i32
  }
}

</mosaic_0001>

<llo_original>
// kernel: _mlp_forward_impl.1
$region0: #{_mlp_forward_impl.1}
  #allocation0 [shape = 'u32[]', space=smem, size = 0x4, offset = 0x4, fixed_abs, tag = 'smem constant byte address 0x4 - core index']
  #allocation1 [shape = 'u32[72,128]{1,0:T(1,128)}', space=vmem, size = 0x9000, scoped, tag = 'internal scratch']
  %s0 = inlined_call_operand.vmem [shape: bf16[8,128], index: 0, kind: input, shape index: {}]
  %s1 = inlined_call_operand.hbm [shape: bf16[128,128], index: 1, kind: input, shape index: {}]
  %s2 = inlined_call_operand.vmem [shape: f32[1,128], index: 2, kind: input, shape index: {}]
  %s3 = inlined_call_operand.hbm [shape: bf16[128,128], index: 3, kind: input, shape index: {}]
  %s4 = inlined_call_operand.vmem [shape: f32[1,128], index: 4, kind: input, shape index: {}]
  %s5 = inlined_call_operand.hbm [shape: f32[8,128], index: 5, kind: output, shape index: {}]
  %s6 = sld [smem:[#allocation0]]
  $region38: #{_mlp_forward_impl.1} parent=0
    _
  %s8 = ssub.s32 1, %s6
  %s9 = scalar_select 0, %s8, %s6
  $region1: #{_mlp_forward_impl.1} parent=0
    #allocation2 [shape = 'u8[32768]{0}', space=vmem, size = 0x8000, scoped, tag = 'input window, operand 1, single buffered']
    #allocation3 [shape = 's32[1]{0}', space=sflag, size = 0x4, scoped, tag = 'scoped memory for _mlp_forward_impl.1']
    #allocation4 [shape = 's32[1]{0}', space=sflag, size = 0x4, scoped, tag = 'scoped memory for _mlp_forward_impl.1']
    #allocation5 [shape = 'u8[32768]{0}', space=vmem, size = 0x8000, scoped, tag = 'input window, operand 3, single buffered']
    #allocation6 [shape = 's32[1]{0}', space=sflag, size = 0x4, scoped, tag = 'scoped memory for _mlp_forward_impl.1']
    #allocation7 [shape = 'u8[4096]{0}', space=vmem, size = 0x1000, scoped, tag = 'output window, operand 0, single buffered']
    %10 = vsyncpa [#allocation3], 0
    %11 = vsyncpa [#allocation6], 0
    %12 = vsyncpa [#allocation4], 0
    // Predicated region
    $region2: #{_mlp_forward_impl.1} parent=1 // pred_check
      _
    $region3: #{_mlp_forward_impl.1} parent=1 // pred_check_branch
      %14 = sbr.rel (0) target = $region5
    $region4: #{_mlp_forward_impl.1} parent=1 // pred_region
      _
    $region5: #{_mlp_forward_impl.1} parent=1 // pred_fallthru
      _
    // Predicated region
    $region6: #{_mlp_forward_impl.1} parent=1 // pred_check
      _
    $region7: #{_mlp_forward_impl.1} parent=1 // pred_check_branch
      %16 = sbr.rel (0) target = $region9
    $region8: #{_mlp_forward_impl.1} parent=1 // pred_region
      %18 = vsyncadd [#allocation3], 0
      %s19 = sshll.u32 %s1, 4
      %s20 = int_to_ptr.hbm [resolvable:$true] %s19
      %s21 = sshll.u32 [#allocation2], 4
      %s22 = int_to_ptr.vmem [resolvable:$true] %s21
      %27 = dma.hbm_to_vmem [thread:$0]  %s20, 1024, %s22, [#allocation3], 64, 64, 4
    $region9: #{_mlp_forward_impl.1} parent=1 // pred_fallthru
      _
    // Predicated region
    $region10: #{_mlp_forward_impl.1} parent=1 // pred_check
      _
    $region11: #{_mlp_forward_impl.1} parent=1 // pred_check_branch
      %29 = sbr.rel (0) target = $region13
    $region12: #{_mlp_forward_impl.1} parent=1 // pred_region
      _
    $region13: #{_mlp_forward_impl.1} parent=1 // pred_fallthru
      _
    // Predicated region
    $region14: #{_mlp_forward_impl.1} parent=1 // pred_check
      _
    $region15: #{_mlp_forward_impl.1} parent=1 // pred_check_branch
      %31 = sbr.rel (0) target = $region17
    $region16: #{_mlp_forward_impl.1} parent=1 // pred_region
      %33 = vsyncadd [#allocation6], 0
      %s34 = sshll.u32 %s3, 4
      %s35 = int_to_ptr.hbm [resolvable:$true] %s34
      %s36 = sshll.u32 [#allocation5], 4
      %s37 = int_to_ptr.vmem [resolvable:$true] %s36
      %42 = dma.hbm_to_vmem [thread:$0]  %s35, 1024, %s37, [#allocation6], 64, 64, 4
    $region17: #{_mlp_forward_impl.1} parent=1 // pred_fallthru
      _
    // Predicated region
    $region18: #{_mlp_forward_impl.1} parent=1 // pred_check
      _
    $region19: #{_mlp_forward_impl.1} parent=1 // pred_check_branch
      %44 = sbr.rel (0) target = $region21
    $region20: #{_mlp_forward_impl.1} parent=1 // pred_region
      _
    $region21: #{_mlp_forward_impl.1} parent=1 // pred_fallthru
      _
    // Predicated region
    $region22: #{_mlp_forward_impl.1} parent=1 // pred_check
      _
    $region23: #{_mlp_forward_impl.1} parent=1 // pred_check_branch
      %46 = sbr.rel (0) target = $region25
    $region24: #{_mlp_forward_impl.1} parent=1 // pred_region
      %48 = dma.done [#allocation3], 1024
    $region25: #{_mlp_forward_impl.1} parent=1 // pred_fallthru
      _
    // Predicated region
    $region26: #{_mlp_forward_impl.1} parent=1 // pred_check
      _
    $region27: #{_mlp_forward_impl.1} parent=1 // pred_check_branch
      %50 = sbr.rel (0) target = $region29
    $region28: #{_mlp_forward_impl.1} parent=1 // pred_region
      %52 = dma.done [#allocation6], 1024
    $region29: #{_mlp_forward_impl.1} parent=1 // pred_fallthru
      _
    %v53 = vld [vmem:[%s0] sm:$0xf]
    %v54 = vld [vmem:[#allocation2] sm:$0xf]
    %v55 = vld [vmem:[#allocation2 + $0x4] sm:$0xf]
    %v56 = vld [vmem:[#allocation2 + $0x8] sm:$0xf]
    %v57 = vld [vmem:[#allocation2 + $0xc] sm:$0xf]
    %v58 = vld [vmem:[#allocation2 + $0x10] sm:$0xf]
    %v59 = vld [vmem:[#allocation2 + $0x14] sm:$0xf]
    %v60 = vld [vmem:[#allocation2 + $0x18] sm:$0xf]
    %v61 = vld [vmem:[#allocation2 + $0x1c] sm:$0xf]
    %v62 = vld [vmem:[#allocation2 + $0x20] sm:$0xf]
    %v63 = vld [vmem:[#allocation2 + $0x24] sm:$0xf]
    %v64 = vld [vmem:[#allocation2 + $0x28] sm:$0xf]
    %v65 = vld [vmem:[#allocation2 + $0x2c] sm:$0xf]
    %v66 = vld [vmem:[#allocation2 + $0x30] sm:$0xf]
    %v67 = vld [vmem:[#allocation2 + $0x34] sm:$0xf]
    %v68 = vld [vmem:[#allocation2 + $0x38] sm:$0xf]
    %v69 = vld [vmem:[#allocation2 + $0x3c] sm:$0xf]
    %v70 = vld [vmem:[%s2] sm:$0x1]
    %v72 = vperm.slane %v70, 0
    %v90 = vunpack.c.l.b16 %v54
    %v91 = vunpack.c.l.b16 %v55
    %v92 = vunpack.c.l.b16 %v56
    %v93 = vunpack.c.l.b16 %v57
    %v94 = vunpack.c.l.b16 %v58
    %v95 = vunpack.c.l.b16 %v59
    %v96 = vunpack.c.l.b16 %v60
    %v97 = vunpack.c.l.b16 %v61
    %v98 = vunpack.c.l.b16 %v62
    %v99 = vunpack.c.l.b16 %v63
    %v100 = vunpack.c.l.b16 %v64
    %v101 = vunpack.c.l.b16 %v65
    %v102 = vunpack.c.l.b16 %v66
    %v103 = vunpack.c.l.b16 %v67
    %v104 = vunpack.c.l.b16 %v68
    %v105 = vunpack.c.l.b16 %v69
    %v106 = vpack.c.b16 %v91, %v90
    %v107 = vpack.c.b16 %v93, %v92
    %v108 = vpack.c.b16 %v95, %v94
    %v109 = vpack.c.b16 %v97, %v96
    %v110 = vpack.c.b16 %v99, %v98
    %v111 = vpack.c.b16 %v101, %v100
    %v112 = vpack.c.b16 %v103, %v102
    %v113 = vpack.c.b16 %v105, %v104
    %122 = vmatpush.bf16.msra.mxu0 %v113
    %123 = vmatpush.bf16.msra.mxu0 %v112
    %124 = vmatpush.bf16.msra.mxu0 %v111
    %125 = vmatpush.bf16.msra.mxu0 %v110
    %126 = vmatpush.bf16.msra.mxu0 %v109
    %127 = vmatpush.bf16.msra.mxu0 %v108
    %128 = vmatpush.bf16.msra.mxu0 %v107
    %129 = vmatpush.bf16.msra.mxu0 %v106
    %130 = vmatmul.bf16.gmra.mxu0 %v53
    %v131 = vpop.f32.mrf.mxu0
    %v132 = vadd.f32 %v72, %v131
    %v133 = vpop.f32.mrf.mxu0
    %134 = vdwg.mxu0
    %v135 = vmax.f32 %v132, 0.0
    %v136 = vpack.c.bf16 %v135, %v135
    %v137 = vld [vmem:[#allocation5] sm:$0xf]
    %v138 = vld [vmem:[#allocation5 + $0x4] sm:$0xf]
    %v139 = vld [vmem:[#allocation5 + $0x8] sm:$0xf]
    %v140 = vld [vmem:[#allocation5 + $0xc] sm:$0xf]
    %v141 = vld [vmem:[#allocation5 + $0x10] sm:$0xf]
    %v142 = vld [vmem:[#allocation5 + $0x14] sm:$0xf]
    %v143 = vld [vmem:[#allocation5 + $0x18] sm:$0xf]
    %v144 = vld [vmem:[#allocation5 + $0x1c] sm:$0xf]
    %v145 = vld [vmem:[#allocation5 + $0x20] sm:$0xf]
    %v146 = vld [vmem:[#allocation5 + $0x24] sm:$0xf]
    %v147 = vld [vmem:[#allocation5 + $0x28] sm:$0xf]
    %v148 = vld [vmem:[#allocation5 + $0x2c] sm:$0xf]
    %v149 = vld [vmem:[#allocation5 + $0x30] sm:$0xf]
    %v150 = vld [vmem:[#allocation5 + $0x34] sm:$0xf]
    %v151 = vld [vmem:[#allocation5 + $0x38] sm:$0xf]
    %v152 = vld [vmem:[#allocation5 + $0x3c] sm:$0xf]
    %v153 = vld [vmem:[%s4] sm:$0x1]
    %v155 = vperm.slane %v153, 0
    %v173 = vunpack.c.l.b16 %v137
    %v174 = vunpack.c.l.b16 %v138
    %v175 = vunpack.c.l.b16 %v139
    %v176 = vunpack.c.l.b16 %v140
    %v177 = vunpack.c.l.b16 %v141
    %v178 = vunpack.c.l.b16 %v142
    %v179 = vunpack.c.l.b16 %v143
    %v180 = vunpack.c.l.b16 %v144
    %v181 = vunpack.c.l.b16 %v145
    %v182 = vunpack.c.l.b16 %v146
    %v183 = vunpack.c.l.b16 %v147
    %v184 = vunpack.c.l.b16 %v148
    %v185 = vunpack.c.l.b16 %v149
    %v186 = vunpack.c.l.b16 %v150
    %v187 = vunpack.c.l.b16 %v151
    %v188 = vunpack.c.l.b16 %v152
    %v189 = vpack.c.b16 %v174, %v173
    %v190 = vpack.c.b16 %v176, %v175
    %v191 = vpack.c.b16 %v178, %v177
    %v192 = vpack.c.b16 %v180, %v179
    %v193 = vpack.c.b16 %v182, %v181
    %v194 = vpack.c.b16 %v184, %v183
    %v195 = vpack.c.b16 %v186, %v185
    %v196 = vpack.c.b16 %v188, %v187
    %205 = vmatpush.bf16.msra.mxu0 %v196
    %206 = vmatpush.bf16.msra.mxu0 %v195
    %207 = vmatpush.bf16.msra.mxu0 %v194
    %208 = vmatpush.bf16.msra.mxu0 %v193
    %209 = vmatpush.bf16.msra.mxu0 %v192
    %210 = vmatpush.bf16.msra.mxu0 %v191
    %211 = vmatpush.bf16.msra.mxu0 %v190
    %212 = vmatpush.bf16.msra.mxu0 %v189
    %213 = vmatmul.bf16.gmra.mxu0 %v136
    %v214 = vpop.f32.mrf.mxu0
    %v215 = vadd.f32 %v155, %v214
    %v216 = vpop.f32.mrf.mxu0
    %217 = vdwg.mxu0
    %218 = vmax.xlane.f32.xlu0 %v215
    %v219 = vpop.xlane.xlu0 %218
    %v220 = vsub.f32 %v215, %v219
    %v221 = vmul.f32 %v220, 1.442695
    %v222 = vpow.pop %v221
    %223 = vadd.xlane.f32.xlu0 %v222
    %v224 = vpop.xlane.xlu0 %223
    %v225 = vlog2.pop %v224
    %v226 = vmul.f32 %v225, 0.6931472
    %v227 = vsub.f32 %v220, %v226
    %228 = vst [vmem:[#allocation7] sm:$0xff] %v227
    // Predicated region
    $region30: #{_mlp_forward_impl.1} parent=1 // pred_check
      _
    $region31: #{_mlp_forward_impl.1} parent=1 // pred_check_branch
      %230 = sbr.rel (0) target = $region33
    $region32: #{_mlp_forward_impl.1} parent=1 // pred_region
      %232 = vsyncadd [#allocation4], 0
      %s234 = sshll.u32 [#allocation7], 4
      %s235 = int_to_ptr.vmem [resolvable:$true] %s234
      %s236 = sshll.u32 %s5, 4
      %s237 = int_to_ptr.hbm [resolvable:$true] %s236
      %239 = dma.vmem_to_hbm [thread:$0]  %s235, 128, %s237, [#allocation4]
    $region33: #{_mlp_forward_impl.1} parent=1 // pred_fallthru
      _
    // Predicated region
    $region34: #{_mlp_forward_impl.1} parent=1 // pred_check
      _
    $region35: #{_mlp_forward_impl.1} parent=1 // pred_check_branch
      %241 = sbr.rel (0) target = $region37
    $region36: #{_mlp_forward_impl.1} parent=1 // pred_region
      %243 = dma.done [#allocation4], 128
    $region37: #{_mlp_forward_impl.1} parent=1 // pred_fallthru
      _
    %244 = vsyncpa [#allocation3], 1
    %245 = vsyncpa [#allocation6], 1
    %246 = vsyncpa [#allocation4], 1

// kernel: _mlp_forward_impl.1
$region0: #{_mlp_forward_impl.1}
  #allocation0 [shape = 'u32[]', space=smem, size = 0x4, offset = 0x4, fixed_abs, tag = 'smem constant byte address 0x4 - core index']
  #allocation1 [shape = 'u32[72,128]{1,0:T(1,128)}', space=vmem, size = 0x9000, scoped, tag = 'internal scratch']
  %s0 = inlined_call_operand.vmem [shape: bf16[8,128], index: 0, kind: input, shape index: {}]
  %s1 = inlined_call_operand.hbm [shape: bf16[128,128], index: 1, kind: input, shape index: {}]
  %s2 = inlined_call_operand.vmem [shape: f32[1,128], index: 2, kind: input, shape index: {}]
  %s3 = inlined_call_operand.hbm [shape: bf16[128,128], index: 3, kind: input, shape index: {}]
  %s4 = inlined_call_operand.vmem [shape: f32[1,128], index: 4, kind: input, shape index: {}]
  %s5 = inlined_call_operand.hbm [shape: f32[8,128], index: 5, kind: output, shape index: {}]
  %s6 = sld [smem:[#allocation0]]
  $region38: #{_mlp_forward_impl.1} parent=0
    _
  %s8 = ssub.s32 1, %s6
  %s9 = scalar_select 0, %s8, %s6
  $region1: #{_mlp_forward_impl.1} parent=0
    #allocation2 [shape = 'u8[32768]{0}', space=vmem, size = 0x8000, scoped, tag = 'input window, operand 1, single buffered']
    #allocation3 [shape = 's32[1]{0}', space=sflag, size = 0x4, scoped, tag = 'scoped memory for _mlp_forward_impl.1']
    #allocation4 [shape = 's32[1]{0}', space=sflag, size = 0x4, scoped, tag = 'scoped memory for _mlp_forward_impl.1']
    #allocation5 [shape = 'u8[32768]{0}', space=vmem, size = 0x8000, scoped, tag = 'input window, operand 3, single buffered']
    #allocation6 [shape = 's32[1]{0}', space=sflag, size = 0x4, scoped, tag = 'scoped memory for _mlp_forward_impl.1']
    #allocation7 [shape = 'u8[4096]{0}', space=vmem, size = 0x1000, scoped, tag = 'output window, operand 0, single buffered']
    %10 = vsyncpa [#allocation3], 0
    %11 = vsyncpa [#allocation6], 0
    %12 = vsyncpa [#allocation4], 0
    // Predicated region
    $region2: #{_mlp_forward_impl.1} parent=1 // pred_check
      _
    $region3: #{_mlp_forward_impl.1} parent=1 // pred_check_branch
      %14 = sbr.rel (0) target = $region5
    $region4: #{_mlp_forward_impl.1} parent=1 // pred_region
      _
    $region5: #{_mlp_forward_impl.1} parent=1 // pred_fallthru
      _
    // Predicated region
    $region6: #{_mlp_forward_impl.1} parent=1 // pred_check
      _
    $region7: #{_mlp_forward_impl.1} parent=1 // pred_check_branch
      %16 = sbr.rel (0) target = $region9
    $region8: #{_mlp_forward_impl.1} parent=1 // pred_region
      %18 = vsyncadd [#allocation3], 0
      %s19 = sshll.u32 %s1, 4
      %s20 = int_to_ptr.hbm [resolvable:$true] %s19
      %s21 = sshll.u32 [#allocation2], 4
      %s22 = int_to_ptr.vmem [resolvable:$true] %s21
      %27 = dma.hbm_to_vmem [thread:$0]  %s20, 1024, %s22, [#allocation3], 64, 64, 4
    $region9: #{_mlp_forward_impl.1} parent=1 // pred_fallthru
      _
    // Predicated region
    $region10: #{_mlp_forward_impl.1} parent=1 // pred_check
      _
    $region11: #{_mlp_forward_impl.1} parent=1 // pred_check_branch
      %29 = sbr.rel (0) target = $region13
    $region12: #{_mlp_forward_impl.1} parent=1 // pred_region
      _
    $region13: #{_mlp_forward_impl.1} parent=1 // pred_fallthru
      _
    // Predicated region
    $region14: #{_mlp_forward_impl.1} parent=1 // pred_check
      _
    $region15: #{_mlp_forward_impl.1} parent=1 // pred_check_branch
      %31 = sbr.rel (0) target = $region17
    $region16: #{_mlp_forward_impl.1} parent=1 // pred_region
      %33 = vsyncadd [#allocation6], 0
      %s34 = sshll.u32 %s3, 4
      %s35 = int_to_ptr.hbm [resolvable:$true] %s34
      %s36 = sshll.u32 [#allocation5], 4
      %s37 = int_to_ptr.vmem [resolvable:$true] %s36
      %42 = dma.hbm_to_vmem [thread:$0]  %s35, 1024, %s37, [#allocation6], 64, 64, 4
    $region17: #{_mlp_forward_impl.1} parent=1 // pred_fallthru
      _
    // Predicated region
    $region18: #{_mlp_forward_impl.1} parent=1 // pred_check
      _
    $region19: #{_mlp_forward_impl.1} parent=1 // pred_check_branch
      %44 = sbr.rel (0) target = $region21
    $region20: #{_mlp_forward_impl.1} parent=1 // pred_region
      _
    $region21: #{_mlp_forward_impl.1} parent=1 // pred_fallthru
      _
    // Predicated region
    $region22: #{_mlp_forward_impl.1} parent=1 // pred_check
      _
    $region23: #{_mlp_forward_impl.1} parent=1 // pred_check_branch
      %46 = sbr.rel (0) target = $region25
    $region24: #{_mlp_forward_impl.1} parent=1 // pred_region
      %48 = dma.done [#allocation3], 1024
    $region25: #{_mlp_forward_impl.1} parent=1 // pred_fallthru
      _
    // Predicated region
    $region26: #{_mlp_forward_impl.1} parent=1 // pred_check
      _
    $region27: #{_mlp_forward_impl.1} parent=1 // pred_check_branch
      %50 = sbr.rel (0) target = $region29
    $region28: #{_mlp_forward_impl.1} parent=1 // pred_region
      %52 = dma.done [#allocation6], 1024
    $region29: #{_mlp_forward_impl.1} parent=1 // pred_fallthru
      _
    %v53 = vld [vmem:[%s0] sm:$0xf]
    %v54 = vld [vmem:[#allocation2] sm:$0xf]
    %v55 = vld [vmem:[#allocation2 + $0x4] sm:$0xf]
    %v56 = vld [vmem:[#allocation2 + $0x8] sm:$0xf]
    %v57 = vld [vmem:[#allocation2 + $0xc] sm:$0xf]
    %v58 = vld [vmem:[#allocation2 + $0x10] sm:$0xf]
    %v59 = vld [vmem:[#allocation2 + $0x14] sm:$0xf]
    %v60 = vld [vmem:[#allocation2 + $0x18] sm:$0xf]
    %v61 = vld [vmem:[#allocation2 + $0x1c] sm:$0xf]
    %v62 = vld [vmem:[#allocation2 + $0x20] sm:$0xf]
    %v63 = vld [vmem:[#allocation2 + $0x24] sm:$0xf]
    %v64 = vld [vmem:[#allocation2 + $0x28] sm:$0xf]
    %v65 = vld [vmem:[#allocation2 + $0x2c] sm:$0xf]
    %v66 = vld [vmem:[#allocation2 + $0x30] sm:$0xf]
    %v67 = vld [vmem:[#allocation2 + $0x34] sm:$0xf]
    %v68 = vld [vmem:[#allocation2 + $0x38] sm:$0xf]
    %v69 = vld [vmem:[#allocation2 + $0x3c] sm:$0xf]
    %v70 = vld [vmem:[%s2] sm:$0x1]
    %v72 = vperm.slane %v70, 0
    %v90 = vunpack.c.l.b16 %v54
    %v91 = vunpack.c.l.b16 %v55
    %v92 = vunpack.c.l.b16 %v56
    %v93 = vunpack.c.l.b16 %v57
    %v94 = vunpack.c.l.b16 %v58
    %v95 = vunpack.c.l.b16 %v59
    %v96 = vunpack.c.l.b16 %v60
    %v97 = vunpack.c.l.b16 %v61
    %v98 = vunpack.c.l.b16 %v62
    %v99 = vunpack.c.l.b16 %v63
    %v100 = vunpack.c.l.b16 %v64
    %v101 = vunpack.c.l.b16 %v65
    %v102 = vunpack.c.l.b16 %v66
    %v103 = vunpack.c.l.b16 %v67
    %v104 = vunpack.c.l.b16 %v68
    %v105 = vunpack.c.l.b16 %v69
    %v106 = vpack.c.b16 %v91, %v90
    %v107 = vpack.c.b16 %v93, %v92
    %v108 = vpack.c.b16 %v95, %v94
    %v109 = vpack.c.b16 %v97, %v96
    %v110 = vpack.c.b16 %v99, %v98
    %v111 = vpack.c.b16 %v101, %v100
    %v112 = vpack.c.b16 %v103, %v102
    %v113 = vpack.c.b16 %v105, %v104
    %122 = vmatpush.bf16.msra.mxu0 %v113
    %123 = vmatpush.bf16.msra.mxu0 %v112
    %124 = vmatpush.bf16.msra.mxu0 %v111
    %125 = vmatpush.bf16.msra.mxu0 %v110
    %126 = vmatpush.bf16.msra.mxu0 %v109
    %127 = vmatpush.bf16.msra.mxu0 %v108
    %128 = vmatpush.bf16.msra.mxu0 %v107
    %129 = vmatpush.bf16.msra.mxu0 %v106
    %130 = vmatmul.bf16.gmra.mxu0 %v53
    %v131 = vpop.f32.mrf.mxu0
    %v132 = vadd.f32 %v72, %v131
    %v133 = vpop.f32.mrf.mxu0
    %134 = vdwg.mxu0
    %v135 = vmax.f32 %v132, 0.0
    %v136 = vpack.c.bf16 %v135, %v135
    %v137 = vld [vmem:[#allocation5] sm:$0xf]
    %v138 = vld [vmem:[#allocation5 + $0x4] sm:$0xf]
    %v139 = vld [vmem:[#allocation5 + $0x8] sm:$0xf]
    %v140 = vld [vmem:[#allocation5 + $0xc] sm:$0xf]
    %v141 = vld [vmem:[#allocation5 + $0x10] sm:$0xf]
    %v142 = vld [vmem:[#allocation5 + $0x14] sm:$0xf]
    %v143 = vld [vmem:[#allocation5 + $0x18] sm:$0xf]
    %v144 = vld [vmem:[#allocation5 + $0x1c] sm:$0xf]
    %v145 = vld [vmem:[#allocation5 + $0x20] sm:$0xf]
    %v146 = vld [vmem:[#allocation5 + $0x24] sm:$0xf]
    %v147 = vld [vmem:[#allocation5 + $0x28] sm:$0xf]
    %v148 = vld [vmem:[#allocation5 + $0x2c] sm:$0xf]
    %v149 = vld [vmem:[#allocation5 + $0x30] sm:$0xf]
    %v150 = vld [vmem:[#allocation5 + $0x34] sm:$0xf]
    %v151 = vld [vmem:[#allocation5 + $0x38] sm:$0xf]
    %v152 = vld [vmem:[#allocation5 + $0x3c] sm:$0xf]
    %v153 = vld [vmem:[%s4] sm:$0x1]
    %v155 = vperm.slane %v153, 0
    %v173 = vunpack.c.l.b16 %v137
    %v174 = vunpack.c.l.b16 %v138
    %v175 = vunpack.c.l.b16 %v139
    %v176 = vunpack.c.l.b16 %v140
    %v177 = vunpack.c.l.b16 %v141
    %v178 = vunpack.c.l.b16 %v142
    %v179 = vunpack.c.l.b16 %v143
    %v180 = vunpack.c.l.b16 %v144
    %v181 = vunpack.c.l.b16 %v145
    %v182 = vunpack.c.l.b16 %v146
    %v183 = vunpack.c.l.b16 %v147
    %v184 = vunpack.c.l.b16 %v148
    %v185 = vunpack.c.l.b16 %v149
    %v186 = vunpack.c.l.b16 %v150
    %v187 = vunpack.c.l.b16 %v151
    %v188 = vunpack.c.l.b16 %v152
    %v189 = vpack.c.b16 %v174, %v173
    %v190 = vpack.c.b16 %v176, %v175
    %v191 = vpack.c.b16 %v178, %v177
    %v192 = vpack.c.b16 %v180, %v179
    %v193 = vpack.c.b16 %v182, %v181
    %v194 = vpack.c.b16 %v184, %v183
    %v195 = vpack.c.b16 %v186, %v185
    %v196 = vpack.c.b16 %v188, %v187
    %205 = vmatpush.bf16.msra.mxu0 %v196
    %206 = vmatpush.bf16.msra.mxu0 %v195
    %207 = vmatpush.bf16.msra.mxu0 %v194
    %208 = vmatpush.bf16.msra.mxu0 %v193
    %209 = vmatpush.bf16.msra.mxu0 %v192
    %210 = vmatpush.bf16.msra.mxu0 %v191
    %211 = vmatpush.bf16.msra.mxu0 %v190
    %212 = vmatpush.bf16.msra.mxu0 %v189
    %213 = vmatmul.bf16.gmra.mxu0 %v136
    %v214 = vpop.f32.mrf.mxu0
    %v215 = vadd.f32 %v155, %v214
    %v216 = vpop.f32.mrf.mxu0
    %217 = vdwg.mxu0
    %218 = vmax.xlane.f32.xlu0 %v215
    %v219 = vpop.xlane.xlu0 %218
    %v220 = vsub.f32 %v215, %v219
    %v221 = vmul.f32 %v220, 1.442695
    %v222 = vpow.pop %v221
    %223 = vadd.xlane.f32.xlu0 %v222
    %v224 = vpop.xlane.xlu0 %223
    %v225 = vlog2.pop %v224
    %v226 = vmul.f32 %v225, 0.6931472
    %v227 = vsub.f32 %v220, %v226
    %228 = vst [vmem:[#allocation7] sm:$0xff] %v227
    // Predicated region
    $region30: #{_mlp_forward_impl.1} parent=1 // pred_check
      _
    $region31: #{_mlp_forward_impl.1} parent=1 // pred_check_branch
      %230 = sbr.rel (0) target = $region33
    $region32: #{_mlp_forward_impl.1} parent=1 // pred_region
      %232 = vsyncadd [#allocation4], 0
      %s234 = sshll.u32 [#allocation7], 4
      %s235 = int_to_ptr.vmem [resolvable:$true] %s234
      %s236 = sshll.u32 %s5, 4
      %s237 = int_to_ptr.hbm [resolvable:$true] %s236
      %239 = dma.vmem_to_hbm [thread:$0]  %s235, 128, %s237, [#allocation4]
    $region33: #{_mlp_forward_impl.1} parent=1 // pred_fallthru
      _
    // Predicated region
    $region34: #{_mlp_forward_impl.1} parent=1 // pred_check
      _
    $region35: #{_mlp_forward_impl.1} parent=1 // pred_check_branch
      %241 = sbr.rel (0) target = $region37
    $region36: #{_mlp_forward_impl.1} parent=1 // pred_region
      %243 = dma.done [#allocation4], 128
    $region37: #{_mlp_forward_impl.1} parent=1 // pred_fallthru
      _
    %244 = vsyncpa [#allocation3], 1
    %245 = vsyncpa [#allocation6], 1
    %246 = vsyncpa [#allocation4], 1

</llo_original>
